<compile_context>
chip_gen: v6e
topology: v6e:2x2x1
jax: 0.10.0
libtpu: 0.0.40
codegen_flags: <defaults>
</compile_context>

<pallas_src>
import functools

import jax
import jax.numpy as jnp
from jax.experimental import pallas as pl
from jax.experimental.pallas import tpu as pltpu

ALPHA = 0.7
BETA = 0.3
SMOOTH = 1e-06

LANES = 128
SUBLANES = 8
DEFAULT_TILE_ROWS = 4096          # 4096 x 128 f32 = 2 MiB per input block
CHUNK_ROWS = 64                   # inner fused-accumulation slice (8 vregs/input)
VMEM_LIMIT_BYTES = 32 * 1024 * 1024


def _tversky_partial_kernel(pred_ref, target_ref, out_ref, *,
                            rows, tile_rows, chunk, num_tiles):
    """Grid = (tile,).  out_ref (24,128) is resident across the grid and holds
    three (8,128) vreg-shaped partial sums: [sum(p*t); sum(p); sum(t)]."""
    i = pl.program_id(0)

    @pl.when(i == 0)
    def _init():
        out_ref[...] = jnp.zeros_like(out_ref)

    n_chunks = tile_rows // chunk
    groups = chunk // SUBLANES

    def accumulate(mask_rows):
        def body(c, carry):
            pt_a, sp_a, st_a = carry
            r0 = pl.multiple_of(c * chunk, chunk)
            p = jax.nn.sigmoid(pred_ref[pl.ds(r0, chunk), :].astype(jnp.float32))
            t = target_ref[pl.ds(r0, chunk), :].astype(jnp.float32)
            if mask_rows:
                # Row-granular validity vs. the true number of kernel rows.
                row_iota = jax.lax.broadcasted_iota(jnp.int32, (chunk, LANES), 0)
                valid = (i * tile_rows + r0 + row_iota) < rows
                p = jnp.where(valid, p, 0.0)
                t = jnp.where(valid, t, 0.0)
            pt = p * t
            # Fold (chunk,128) -> (8,128) with pure VPU adds (sublane-aligned
            # reshape, no cross-lane traffic).
            pt_a = pt_a + pt.reshape(groups, SUBLANES, LANES).sum(axis=0)
            sp_a = sp_a + p.reshape(groups, SUBLANES, LANES).sum(axis=0)
            st_a = st_a + t.reshape(groups, SUBLANES, LANES).sum(axis=0)
            return pt_a, sp_a, st_a

        zero = jnp.zeros((SUBLANES, LANES), jnp.float32)
        pt_a, sp_a, st_a = jax.lax.fori_loop(
            0, n_chunks, body, (zero, zero, zero), unroll=min(8, n_chunks))

        out_ref[0:SUBLANES, :] += pt_a
        out_ref[SUBLANES:2 * SUBLANES, :] += sp_a
        out_ref[2 * SUBLANES:3 * SUBLANES, :] += st_a

    if rows % tile_rows != 0:
        # Only the last tile over-covers `rows`; compile the mask into that
        # step only so steady-state steps stay on the fast, mask-free path.
        @pl.when(i < num_tiles - 1)
        def _fast():
            accumulate(False)

        @pl.when(i == num_tiles - 1)
        def _masked():
            accumulate(True)
    else:
        accumulate(False)


@functools.partial(jax.jit, static_argnames=("tile_rows",))
def tversky_loss(pred, target, *, tile_rows=DEFAULT_TILE_ROWS):
    """Pallas implementation of TverskyLoss.forward (returns the scalar loss)."""
    pred_flat = pred.reshape(-1)       # keep native dtype in HBM (f32 or bf16)
    target_flat = target.reshape(-1)
    n = pred_flat.shape[0]

    rows = n // LANES
    rows_kernel = (rows // SUBLANES) * SUBLANES      # (8,128)-aligned prefix
    n_kernel = rows_kernel * LANES

    # Remainder (< 8*128 + 128 elements): tiny pure-JAX epilogue, no pad copy.
    if n_kernel < n:
        p_rem = jax.nn.sigmoid(pred_flat[n_kernel:].astype(jnp.float32))
        t_rem = target_flat[n_kernel:].astype(jnp.float32)
        rem_tp = jnp.sum(p_rem * t_rem)
        rem_sp = jnp.sum(p_rem)
        rem_st = jnp.sum(t_rem)
    else:
        rem_tp = rem_sp = rem_st = jnp.float32(0.0)

    if rows_kernel == 0:
        tp, sp, st = rem_tp, rem_sp, rem_st
    else:
        if n_kernel < n:
            pred2d = pred_flat[:n_kernel].reshape(rows_kernel, LANES)
            target2d = target_flat[:n_kernel].reshape(rows_kernel, LANES)
        else:
            pred2d = pred_flat.reshape(rows_kernel, LANES)
            target2d = target_flat.reshape(rows_kernel, LANES)

        # Tile: multiple of 8 (and of the chunk size), never larger than the
        # array so edge blocks stay within array dims.
        tr = min(tile_rows, rows_kernel)
        tr = max(SUBLANES, (tr // SUBLANES) * SUBLANES)
        if tr >= CHUNK_ROWS:
            chunk = CHUNK_ROWS
            tr = (tr // chunk) * chunk
        else:
            chunk = tr
        num_tiles = -(-rows_kernel // tr)

        kernel = functools.partial(
            _tversky_partial_kernel,
            rows=rows_kernel, tile_rows=tr, chunk=chunk, num_tiles=num_tiles)

        out_rows = 3 * SUBLANES
        bytes_in = (pred2d.size * pred2d.dtype.itemsize
                    + target2d.size * target2d.dtype.itemsize)

        partials = pl.pallas_call(
            kernel,
            out_shape=jax.ShapeDtypeStruct((out_rows, LANES), jnp.float32),
            grid_spec=pltpu.PrefetchScalarGridSpec(
                num_scalar_prefetch=0,
                grid=(num_tiles,),
                in_specs=[
                    pl.BlockSpec((tr, LANES), lambda i: (i, 0)),
                    pl.BlockSpec((tr, LANES), lambda i: (i, 0)),
                ],
                out_specs=pl.BlockSpec((out_rows, LANES), lambda i: (0, 0)),
            ),
            compiler_params=pltpu.CompilerParams(
                dimension_semantics=("arbitrary",),
                vmem_limit_bytes=VMEM_LIMIT_BYTES),
            cost_estimate=pl.CostEstimate(
                flops=5 * rows_kernel * LANES,
                transcendentals=2 * rows_kernel * LANES,   # sigmoid = exp + recip
                bytes_accessed=bytes_in + out_rows * LANES * 4),
        )(pred2d, target2d)

        tp = jnp.sum(partials[0:SUBLANES, :]) + rem_tp
        sp = jnp.sum(partials[SUBLANES:2 * SUBLANES, :]) + rem_sp
        st = jnp.sum(partials[2 * SUBLANES:3 * SUBLANES, :]) + rem_st

    # Tversky formula (fn = sum(t) - tp, fp = sum(p) - tp).
    fn = st - tp
    fp = sp - tp
    tversky = (tp + SMOOTH) / (tp + ALPHA * fn + BETA * fp + SMOOTH)
    return 1.0 - tversky


def tversky_loss_ref(pred, target):
    """Pure-JAX reference matching the PyTorch module exactly."""
    p = jax.nn.sigmoid(pred.astype(jnp.float32)).reshape(-1)
    t = target.astype(jnp.float32).reshape(-1)
    tp = jnp.sum(p * t)
    fn = jnp.sum(t * (1.0 - p))
    fp = jnp.sum((1.0 - t) * p)
    return 1.0 - (tp + SMOOTH) / (tp + ALPHA * fn + BETA * fp + SMOOTH)


if __name__ == "__main__":
    key = jax.random.PRNGKey(0)
    k_pred, k_tgt = jax.random.split(key)

    # Main case: small NCHW shape consistent with a segmentation-style loss.
    B, C, H, W = 2, 4, 16, 16
    pred = jax.random.normal(k_pred, (B, C, H, W), dtype=jnp.float32)
    target = (jax.random.uniform(k_tgt, (B, C, H, W)) > 0.5).astype(jnp.float32)

    loss = jax.block_until_ready(tversky_loss(pred, target))
    ref = jax.block_until_ready(tversky_loss_ref(pred, target))
    assert jnp.allclose(loss, ref, atol=1e-5, rtol=1e-5), (loss, ref)

    # Ragged case (n % 1024 != 0): kernel prefix + JAX remainder epilogue.
    pred2 = jax.random.normal(k_pred, (2, 3, 17, 19), dtype=jnp.float32)
    target2 = (jax.random.uniform(k_tgt, (2, 3, 17, 19)) > 0.5).astype(jnp.float32)
    loss2 = jax.block_until_ready(tversky_loss(pred2, target2))
    ref2 = jax.block_until_ready(tversky_loss_ref(pred2, target2))
    assert jnp.allclose(loss2, ref2, atol=1e-5, rtol=1e-5), (loss2, ref2)

    # Multi-tile cases: tile_rows=16 forces a masked last tile (24 % 16 != 0);
    # tile_rows=8 forces 3 unmasked tiles.
    pred3 = jax.random.normal(k_pred, (2, 4, 16, 24), dtype=jnp.float32)
    target3 = (jax.random.uniform(k_tgt, (2, 4, 16, 24)) > 0.5).astype(jnp.float32)
    ref3 = jax.block_until_ready(tversky_loss_ref(pred3, target3))
    loss3a = jax.block_until_ready(tversky_loss(pred3, target3, tile_rows=16))
    assert jnp.allclose(loss3a, ref3, atol=1e-5, rtol=1e-5), (loss3a, ref3)
    loss3b = jax.block_until_ready(tversky_loss(pred3, target3, tile_rows=8))
    assert jnp.allclose(loss3b, ref3, atol=1e-5, rtol=1e-5), (loss3b, ref3)

    # bf16 inputs (halves HBM traffic); kernel upcasts to f32 internally.
    pred_bf = pred.astype(jnp.bfloat16)
    target_bf = target.astype(jnp.bfloat16)
    loss_bf = jax.block_until_ready(tversky_loss(pred_bf, target_bf))
    ref_bf = jax.block_until_ready(tversky_loss_ref(pred_bf, target_bf))
    assert jnp.allclose(loss_bf, ref_bf, atol=1e-4, rtol=1e-4), (loss_bf, ref_bf)

    print("KERNEL_OK")
</pallas_src>

<mosaic_0001>
module attributes {stable_mosaic.version = 11 : i64} {
  func.func @_tversky_partial_kernel(%arg0: i32, %arg1: memref<16x128xf32, #tpu.memory_space<vmem>>, %arg2: memref<16x128xf32, #tpu.memory_space<vmem>>, %arg3: memref<24x128xf32, #tpu.memory_space<vmem>>) attributes {dimension_semantics = [#tpu.dimension_semantics<arbitrary>], iteration_bounds = array<i64: 1>, scalar_prefetch = 0 : i64, scratch_operands = 0 : i64, tpu.core_type = #tpu.core_type<tc>, window_params = [{transform_indices = @transform_0, window_bounds = array<i64: 16, 128>}, {transform_indices = @transform_1, window_bounds = array<i64: 16, 128>}, {pipeline_mode = #tpu.pipeline_mode<synchronous>, transform_indices = @transform_2, window_bounds = array<i64: 24, 128>}]} {
    %c0_i32 = arith.constant 0 : i32
    %0 = arith.cmpi eq, %arg0, %c0_i32 : i32
    %1 = arith.extui %0 : i1 to i32
    %c0_i32_0 = arith.constant 0 : i32
    %2 = arith.cmpi ne, %1, %c0_i32_0 : i32
    scf.if %2 {
      %cst_17 = arith.constant 0.000000e+00 : f32
      %34 = vector.broadcast %cst_17 : f32 to vector<24x128xf32>
      %c0_18 = arith.constant 0 : index
      %c0_19 = arith.constant 0 : index
      %35 = vector.load %arg3[%c0_18, %c0_19] : memref<24x128xf32, #tpu.memory_space<vmem>>, vector<24x128xf32>
      tpu.vector_store %arg3[%c0_18, %c0_19], %34 {strides = array<i32>} : memref<24x128xf32, #tpu.memory_space<vmem>>, vector<24x128xf32>,
    } else {
    }
    %cst = arith.constant 0.000000e+00 : f32
    %3 = vector.broadcast %cst : f32 to vector<8x128xf32>
    %c0_i32_1 = arith.constant 0 : i32
    %c16_i32 = arith.constant 16 : i32
    %4 = arith.muli %c0_i32_1, %c16_i32 : i32
    %5 = tpu.assume_multiple %4, 16 : i32
    %6 = arith.index_cast %5 : i32 to index
    %c0 = arith.constant 0 : index
    %7 = vector.load %arg1[%6, %c0] : memref<16x128xf32, #tpu.memory_space<vmem>>, vector<16x128xf32>
    %8 = arith.negf %7 : vector<16x128xf32>
    %9 = math.exp %8 : vector<16x128xf32>
    %cst_2 = arith.constant 1.000000e+00 : f32
    %10 = vector.broadcast %cst_2 : f32 to vector<16x128xf32>
    %11 = arith.addf %10, %9 : vector<16x128xf32>
    %12 = arith.divf %10, %11 : vector<16x128xf32>
    %13 = arith.index_cast %5 : i32 to index
    %c0_3 = arith.constant 0 : index
    %14 = vector.load %arg2[%13, %c0_3] : memref<16x128xf32, #tpu.memory_space<vmem>>, vector<16x128xf32>
    %15 = arith.mulf %12, %14 : vector<16x128xf32>
    %16 = vector.shape_cast %15 : vector<16x128xf32> to vector<2x8x128xf32>
    %cst_4 = arith.constant dense<0.000000e+00> : vector<8x128xf32>
    %17 = vector.multi_reduction <add>, %16, %cst_4 [0] : vector<2x8x128xf32> to vector<8x128xf32>
    %18 = arith.addf %3, %17 : vector<8x128xf32>
    %19 = vector.shape_cast %12 : vector<16x128xf32> to vector<2x8x128xf32>
    %cst_5 = arith.constant dense<0.000000e+00> : vector<8x128xf32>
    %20 = vector.multi_reduction <add>, %19, %cst_5 [0] : vector<2x8x128xf32> to vector<8x128xf32>
    %21 = arith.addf %3, %20 : vector<8x128xf32>
    %22 = vector.shape_cast %14 : vector<16x128xf32> to vector<2x8x128xf32>
    %cst_6 = arith.constant dense<0.000000e+00> : vector<8x128xf32>
    %23 = vector.multi_reduction <add>, %22, %cst_6 [0] : vector<2x8x128xf32> to vector<8x128xf32>
    %24 = arith.addf %3, %23 : vector<8x128xf32>
    %c1_i32 = arith.constant 1 : i32
    %c0_7 = arith.constant 0 : index
    %c0_8 = arith.constant 0 : index
    %25 = vector.load %arg3[%c0_7, %c0_8] : memref<24x128xf32, #tpu.memory_space<vmem>>, vector<8x128xf32>
    %26 = arith.addf %25, %18 : vector<8x128xf32>
    %c0_9 = arith.constant 0 : index
    %c0_10 = arith.constant 0 : index
    %27 = vector.load %arg3[%c0_9, %c0_10] : memref<24x128xf32, #tpu.memory_space<vmem>>, vector<8x128xf32>
    tpu.vector_store %arg3[%c0_9, %c0_10], %26 {strides = array<i32>} : memref<24x128xf32, #tpu.memory_space<vmem>>, vector<8x128xf32>,
    %c8 = arith.constant 8 : index
    %c0_11 = arith.constant 0 : index
    %28 = vector.load %arg3[%c8, %c0_11] : memref<24x128xf32, #tpu.memory_space<vmem>>, vector<8x128xf32>
    %29 = arith.addf %28, %21 : vector<8x128xf32>
    %c8_12 = arith.constant 8 : index
    %c0_13 = arith.constant 0 : index
    %30 = vector.load %arg3[%c8_12, %c0_13] : memref<24x128xf32, #tpu.memory_space<vmem>>, vector<8x128xf32>
    tpu.vector_store %arg3[%c8_12, %c0_13], %29 {strides = array<i32>} : memref<24x128xf32, #tpu.memory_space<vmem>>, vector<8x128xf32>,
    %c16 = arith.constant 16 : index
    %c0_14 = arith.constant 0 : index
    %31 = vector.load %arg3[%c16, %c0_14] : memref<24x128xf32, #tpu.memory_space<vmem>>, vector<8x128xf32>
    %32 = arith.addf %31, %24 : vector<8x128xf32>
    %c16_15 = arith.constant 16 : index
    %c0_16 = arith.constant 0 : index
    %33 = vector.load %arg3[%c16_15, %c0_16] : memref<24x128xf32, #tpu.memory_space<vmem>>, vector<8x128xf32>
    tpu.vector_store %arg3[%c16_15, %c0_16], %32 {strides = array<i32>} : memref<24x128xf32, #tpu.memory_space<vmem>>, vector<8x128xf32>,
    return
  }
  func.func @transform_0(%arg0: i32) -> (i32, i32) {
    %c0_i32 = arith.constant 0 : i32
    %c0_i32_0 = arith.constant 0 : i32
    return %arg0, %c0_i32 : i32, i32
  }
  func.func @transform_1(%arg0: i32) -> (i32, i32) {
    %c0_i32 = arith.constant 0 : i32
    %c0_i32_0 = arith.constant 0 : i32
    return %arg0, %c0_i32 : i32, i32
  }
  func.func @transform_2(%arg0: i32) -> (i32, i32) {
    %c0_i32 = arith.constant 0 : i32
    %c0_i32_0 = arith.constant 0 : i32
    %c0_i32_1 = arith.constant 0 : i32
    return %c0_i32, %c0_i32_0 : i32, i32
  }
}

</mosaic_0001>

<llo_original>
// kernel: tversky_loss.1
$region0: #{tversky_loss.1}
  #allocation0 [shape = 'u32[]', space=smem, size = 0x4, offset = 0x4, fixed_abs, tag = 'smem constant byte address 0x4 - core index']
  #allocation1 [shape = 'u32[144,128]{1,0:T(1,128)}', space=vmem, size = 0x12000, scoped, tag = 'internal scratch']
  %s0 = inlined_call_operand.vmem [shape: f32[16,128], index: 0, kind: input, shape index: {}]
  %s1 = inlined_call_operand.vmem [shape: f32[16,128], index: 1, kind: input, shape index: {}]
  %s2 = inlined_call_operand.vmem [shape: f32[24,128], index: 2, kind: output, shape index: {}]
  %s3 = sld [smem:[#allocation0]]
  $region22: #{tversky_loss.1} parent=0
    _
  %s5 = ssub.s32 1, %s3
  %s6 = scalar_select 0, %s5, %s3
  // Predicated region
  $region2: #{tversky_loss.1} parent=0 // pred_check
    _
  $region3: #{tversky_loss.1} parent=0 // pred_check_branch
    %8 = sbr.rel (0) target = $region5
  $region4: #{tversky_loss.1} parent=0 // pred_region
    _
  $region5: #{tversky_loss.1} parent=0 // pred_fallthru
    _
  // Predicated region
  $region6: #{tversky_loss.1} parent=0 // pred_check
    _
  $region7: #{tversky_loss.1} parent=0 // pred_check_branch
    %10 = sbr.rel (0) target = $region9
  $region8: #{tversky_loss.1} parent=0 // pred_region
    _
  $region9: #{tversky_loss.1} parent=0 // pred_fallthru
    _
  %p11 = scmp.eq.s32.totalorder 0, 0
  // Predicated region
  $region10: #{tversky_loss.1} parent=0 // pred_check
    %p12 = pneg %p11
  $region11: #{tversky_loss.1} parent=0 // pred_check_branch
    %14 = sbr.rel (%p12) target = $region13
  $region12: #{tversky_loss.1} parent=0 // pred_region
    %15 = vst [vmem:[%s2] sm:$0xff] 0.0
    %16 = vst [vmem:[%s2 + $0x8] sm:$0xff] 0.0
    %17 = vst [vmem:[%s2 + $0x10] sm:$0xff] 0.0
  $region13: #{tversky_loss.1} parent=0 // pred_fallthru
    _
  %v18 = vld [vmem:[%s0] sm:$0xff]
  %v19 = vld [vmem:[%s0 + $0x8] sm:$0xff]
  %v20 = vxor.u32 %v18, 2147483648
  %v21 = vxor.u32 %v19, 2147483648
  %v22 = vmul.f32 %v20, 1.442695
  %v23 = vpow.pop %v22
  %v24 = vmul.f32 %v21, 1.442695
  %v25 = vpow.pop %v24
  %v26 = vadd.f32 %v23, 1.0
  %v27 = vadd.f32 %v25, 1.0
  %v28 = vrcp.pop %v26
  %v29 = vmul.f32 1.0, %v28
  %v30 = vrcp.pop %v27
  %v31 = vmul.f32 1.0, %v30
  %v32 = vld [vmem:[%s1] sm:$0xff]
  %v33 = vld [vmem:[%s1 + $0x8] sm:$0xff]
  %v34 = vmul.f32 %v29, %v32
  %v35 = vmul.f32 %v31, %v33
  %v36 = vadd.f32 %v34, %v35
  %v37 = vadd.f32 %v36, 0.0
  %v38 = vadd.f32 %v29, %v31
  %v39 = vadd.f32 %v38, 0.0
  %v40 = vadd.f32 %v32, %v33
  %v41 = vadd.f32 %v40, 0.0
  %v42 = vld [vmem:[%s2] sm:$0xff]
  %v43 = vadd.f32 %v42, %v37
  %44 = vst [vmem:[%s2] sm:$0xff] %v43
  %v45 = vld [vmem:[%s2 + $0x8] sm:$0xff]
  %v46 = vadd.f32 %v45, %v39
  %47 = vst [vmem:[%s2 + $0x8] sm:$0xff] %v46
  %v48 = vld [vmem:[%s2 + $0x10] sm:$0xff]
  %v49 = vadd.f32 %v48, %v41
  %50 = vst [vmem:[%s2 + $0x10] sm:$0xff] %v49
  // Predicated region
  $region14: #{tversky_loss.1} parent=0 // pred_check
    _
  $region15: #{tversky_loss.1} parent=0 // pred_check_branch
    %52 = sbr.rel (0) target = $region17
  $region16: #{tversky_loss.1} parent=0 // pred_region
    _
  $region17: #{tversky_loss.1} parent=0 // pred_fallthru
    _
  // Predicated region
  $region18: #{tversky_loss.1} parent=0 // pred_check
    _
  $region19: #{tversky_loss.1} parent=0 // pred_check_branch
    %54 = sbr.rel (0) target = $region21
  $region20: #{tversky_loss.1} parent=0 // pred_region
    _
  $region21: #{tversky_loss.1} parent=0 // pred_fallthru
    _

</llo_original>
